<compile_context>
chip_gen: v7x
topology: tpu7x:2x2x1
jax: 0.10.0
libtpu: 0.0.40
codegen_flags: <defaults>
</compile_context>

<pallas_src>
import math

import jax
import jax.numpy as jnp
from jax.experimental import pallas as pl
from jax.experimental.pallas import tpu as pltpu


def _round_up(x: int, m: int) -> int:
    return ((x + m - 1) // m) * m


# ----------------------------- Pallas kernel ------------------------------ #
def _ensemble_linear_kernel(x_ref, r_ref, wt_ref, s_ref, b_ref, o_ref):
    # x_ref : (TM, Dp)   row tile of the (padded) input
    # r_ref : (TM, Dp)   per-row input scaling, one tile's worth (row pattern
    #                    repeats every K rows) -- constant block, VMEM resident
    # wt_ref: (Dp, TN)   column tile of padded, pre-transposed weight
    # s_ref : (TM, TN)   per-row output scaling tile (f32)
    # b_ref : (TM, TN)   per-row bias tile (f32)
    # o_ref : (TM, TN)
    xr = x_ref[...] * r_ref[...]
    y = jnp.dot(xr, wt_ref[...], preferred_element_type=jnp.float32)
    y = y * s_ref[...] + b_ref[...]
    o_ref[...] = y.astype(o_ref.dtype)


# ------------------------------- wrapper ----------------------------------- #
def ensemble_linear(x, weight, r, s, bias, *, k, tile_m=256, tile_n=256):
    """Pallas implementation of LinearEfficientEnsemble.forward.

    x:      (B*K, D)   row i belongs to batch i // K, ensemble member i % K
    weight: (Dout, D)
    r:      (K, D)      or None
    s:      (K, Dout)   or None
    bias:   (Dout,) or (K, Dout) or None
    """
    n, d = x.shape
    dout, d_w = weight.shape
    assert d_w == d
    assert n % k == 0

    # ---- tile / padding geometry -------------------------------------------
    row_step = (8 * k) // math.gcd(8, k)                 # lcm(8, k)
    tile_m = max(row_step, (tile_m // row_step) * row_step)
    tile_m = min(tile_m, _round_up(n, row_step))         # don't over-tile tiny n
    n_pad = _round_up(n, tile_m)

    d_pad = _round_up(d, 128)
    tile_n = max(128, (min(tile_n, _round_up(dout, 128)) // 128) * 128)
    dout_pad = _round_up(dout, tile_n)

    reps = tile_m // k                                    # tile_m % k == 0

    # ---- pad operands (zero padding is neutral for the matmul) --------------
    x_p = jnp.pad(x, ((0, n_pad - n), (0, d_pad - d)))
    w_t = jnp.pad(weight.T.astype(x.dtype), ((0, d_pad - d), (0, dout_pad - dout)))

    # One tile's worth of per-row parameters (small: (tile_m, .)), loaded once.
    if r is None:
        r_tile = jnp.ones((tile_m, d_pad), x.dtype)
    else:
        r_p = jnp.pad(r.astype(x.dtype), ((0, 0), (0, d_pad - d)))
        r_tile = jnp.tile(r_p, (reps, 1))                 # (tile_m, Dp)

    if s is None:
        s_tile = jnp.ones((tile_m, dout_pad), jnp.float32)
    else:
        s_p = jnp.pad(s.astype(jnp.float32), ((0, 0), (0, dout_pad - dout)))
        s_tile = jnp.tile(s_p, (reps, 1))                 # (tile_m, Doutp)

    if bias is None:
        b_tile = jnp.zeros((tile_m, dout_pad), jnp.float32)
    elif bias.ndim == 1:
        b_p = jnp.pad(bias.astype(jnp.float32), (0, dout_pad - dout))
        b_tile = jnp.broadcast_to(b_p, (tile_m, dout_pad))
    else:
        b_p = jnp.pad(bias.astype(jnp.float32), ((0, 0), (0, dout_pad - dout)))
        b_tile = jnp.tile(b_p, (reps, 1))                 # (tile_m, Doutp)

    grid = (n_pad // tile_m, dout_pad // tile_n)

    out_padded = pl.pallas_call(
        _ensemble_linear_kernel,
        out_shape=jax.ShapeDtypeStruct((n_pad, dout_pad), x.dtype),
        grid_spec=pltpu.PrefetchScalarGridSpec(
            num_scalar_prefetch=0,
            grid=grid,
            in_specs=[
                pl.BlockSpec((tile_m, d_pad), lambda i, j: (i, 0)),    # x
                pl.BlockSpec((tile_m, d_pad), lambda i, j: (0, 0)),    # r tile
                pl.BlockSpec((d_pad, tile_n), lambda i, j: (0, j)),    # W^T cols
                pl.BlockSpec((tile_m, tile_n), lambda i, j: (0, j)),   # s tile
                pl.BlockSpec((tile_m, tile_n), lambda i, j: (0, j)),   # b tile
            ],
            out_specs=pl.BlockSpec((tile_m, tile_n), lambda i, j: (i, j)),
        ),
        compiler_params=pltpu.CompilerParams(
            dimension_semantics=("parallel", "parallel"),
            vmem_limit_bytes=48 * 1024 * 1024,
        ),
    )(x_p, r_tile, w_t, s_tile, b_tile)

    return out_padded[:n, :dout]


# ------------------------- deterministic parameters ------------------------ #
def init_rsqrt_uniform(key, shape, d, dtype=jnp.float32):
    bound = d ** (-0.5)
    return jax.random.uniform(key, shape, dtype, minval=-bound, maxval=bound)


def init_random_signs(key, shape, dtype=jnp.float32):
    return jax.random.bernoulli(key, 0.5, shape).astype(dtype) * 2.0 - 1.0


def make_params(key, in_features, out_features, k, *,
                ensemble_scaling_in=True, ensemble_scaling_out=True,
                bias=True, ensemble_bias=True,
                scaling_init="random-signs"):
    kw, kr, ks, kb = jax.random.split(key, 4)
    weight = init_rsqrt_uniform(kw, (out_features, in_features), in_features)

    def scale_init(kk, shape):
        if scaling_init == "ones":
            return jnp.ones(shape, jnp.float32)
        return init_random_signs(kk, shape)

    r = scale_init(kr, (k, in_features)) if ensemble_scaling_in else None
    s = scale_init(ks, (k, out_features)) if ensemble_scaling_out else None

    if bias and not ensemble_bias:
        b = init_rsqrt_uniform(kb, (out_features,), in_features)
    elif ensemble_bias:
        # PyTorch init copies one (out_features,) rsqrt-uniform vector into
        # every ensemble row of the (k, out_features) bias.
        b1 = init_rsqrt_uniform(kb, (out_features,), in_features)
        b = jnp.broadcast_to(b1, (k, out_features))
    else:
        b = None
    return weight, r, s, b


# ------------------------------- reference --------------------------------- #
def reference_forward(x, weight, r, s, bias, *, k):
    n, d = x.shape
    b = n // k
    xv = x.reshape(b, k, d)
    if r is not None:
        xv = xv * r
    y = jnp.einsum("bkd,od->bko", xv, weight)
    if s is not None:
        y = y * s
    if bias is not None:
        y = y + bias
    return y.reshape(n, -1)


if __name__ == "__main__":
    key = jax.random.PRNGKey(0)
    in_features, out_features, k, batch = 32, 64, 4, 8   # B*K = 32 rows
    kx, kp = jax.random.split(key)

    x = jax.random.normal(kx, (batch * k, in_features), jnp.float32)
    weight, r, s, bias = make_params(
        kp, in_features, out_features, k,
        ensemble_scaling_in=True, ensemble_scaling_out=True,
        bias=True, ensemble_bias=True, scaling_init="random-signs")

    out = ensemble_linear(x, weight, r, s, bias, k=k)
    out = jax.block_until_ready(out)

    ref = reference_forward(x, weight, r, s, bias, k=k)
    assert out.shape == (batch * k, out_features)
    assert jnp.allclose(out, ref, atol=1e-5, rtol=1e-5), "mismatch vs reference"
    print("KERNEL_OK")
</pallas_src>

<mosaic_0001>
module attributes {stable_mosaic.version = 11 : i64} {
  func.func @_ensemble_linear_kernel(%arg0: i32, %arg1: i32, %arg2: memref<32x128xf32, #tpu.memory_space<vmem>>, %arg3: memref<32x128xf32, #tpu.memory_space<vmem>>, %arg4: memref<128x128xf32, #tpu.memory_space<vmem>>, %arg5: memref<32x128xf32, #tpu.memory_space<vmem>>, %arg6: memref<32x128xf32, #tpu.memory_space<vmem>>, %arg7: memref<32x128xf32, #tpu.memory_space<vmem>>) attributes {dimension_semantics = [#tpu.dimension_semantics<parallel>, #tpu.dimension_semantics<parallel>], iteration_bounds = array<i64: 1, 1>, scalar_prefetch = 0 : i64, scratch_operands = 0 : i64, tpu.core_type = #tpu.core_type<tc>, window_params = [{transform_indices = @transform_0, window_bounds = array<i64: 32, 128>}, {pipeline_mode = #tpu.pipeline_mode<synchronous>, transform_indices = @transform_1, window_bounds = array<i64: 32, 128>}, {transform_indices = @transform_2, window_bounds = array<i64: 128, 128>}, {transform_indices = @transform_3, window_bounds = array<i64: 32, 128>}, {transform_indices = @transform_4, window_bounds = array<i64: 32, 128>}, {transform_indices = @transform_5, window_bounds = array<i64: 32, 128>}]} {
    %c0 = arith.constant 0 : index
    %c0_0 = arith.constant 0 : index
    %0 = vector.load %arg2[%c0, %c0_0] : memref<32x128xf32, #tpu.memory_space<vmem>>, vector<32x128xf32>
    %c0_1 = arith.constant 0 : index
    %c0_2 = arith.constant 0 : index
    %1 = vector.load %arg3[%c0_1, %c0_2] : memref<32x128xf32, #tpu.memory_space<vmem>>, vector<32x128xf32>
    %2 = arith.mulf %0, %1 : vector<32x128xf32>
    %c0_3 = arith.constant 0 : index
    %c0_4 = arith.constant 0 : index
    %3 = vector.load %arg4[%c0_3, %c0_4] : memref<128x128xf32, #tpu.memory_space<vmem>>, vector<128x128xf32>
    %cst = arith.constant dense<0.000000e+00> : vector<32x128xf32>
    %4 = tpu.matmul %2, %3, %cst {dimension_numbers = #tpu.dot_dimension_numbers<[1], [0], [0], [1], [0, 0, 1, 1], [], []>} : vector<32x128xf32>, vector<128x128xf32>, vector<32x128xf32> -> vector<32x128xf32>
    %c0_5 = arith.constant 0 : index
    %c0_6 = arith.constant 0 : index
    %5 = vector.load %arg5[%c0_5, %c0_6] : memref<32x128xf32, #tpu.memory_space<vmem>>, vector<32x128xf32>
    %6 = arith.mulf %4, %5 : vector<32x128xf32>
    %c0_7 = arith.constant 0 : index
    %c0_8 = arith.constant 0 : index
    %7 = vector.load %arg6[%c0_7, %c0_8] : memref<32x128xf32, #tpu.memory_space<vmem>>, vector<32x128xf32>
    %8 = arith.addf %6, %7 : vector<32x128xf32>
    %c0_9 = arith.constant 0 : index
    %c0_10 = arith.constant 0 : index
    %9 = vector.load %arg7[%c0_9, %c0_10] : memref<32x128xf32, #tpu.memory_space<vmem>>, vector<32x128xf32>
    tpu.vector_store %arg7[%c0_9, %c0_10], %8 {strides = array<i32>} : memref<32x128xf32, #tpu.memory_space<vmem>>, vector<32x128xf32>,
    return
  }
  func.func @transform_0(%arg0: i32, %arg1: i32) -> (i32, i32) {
    %c0_i32 = arith.constant 0 : i32
    %c0_i32_0 = arith.constant 0 : i32
    return %arg0, %c0_i32 : i32, i32
  }
  func.func @transform_1(%arg0: i32, %arg1: i32) -> (i32, i32) {
    %c0_i32 = arith.constant 0 : i32
    %c0_i32_0 = arith.constant 0 : i32
    %c0_i32_1 = arith.constant 0 : i32
    return %c0_i32, %c0_i32_0 : i32, i32
  }
  func.func @transform_2(%arg0: i32, %arg1: i32) -> (i32, i32) {
    %c0_i32 = arith.constant 0 : i32
    %c0_i32_0 = arith.constant 0 : i32
    return %c0_i32, %arg1 : i32, i32
  }
  func.func @transform_3(%arg0: i32, %arg1: i32) -> (i32, i32) {
    %c0_i32 = arith.constant 0 : i32
    %c0_i32_0 = arith.constant 0 : i32
    return %c0_i32, %arg1 : i32, i32
  }
  func.func @transform_4(%arg0: i32, %arg1: i32) -> (i32, i32) {
    %c0_i32 = arith.constant 0 : i32
    %c0_i32_0 = arith.constant 0 : i32
    return %c0_i32, %arg1 : i32, i32
  }
  func.func @transform_5(%arg0: i32, %arg1: i32) -> (i32, i32) {
    %c0_i32 = arith.constant 0 : i32
    return %arg0, %arg1 : i32, i32
  }
}

</mosaic_0001>

<llo_original>
// kernel: tpu_custom_call.1
$region0: #{tpu_custom_call.1}
  #allocation0 [shape = 'u32[]', space=smem, size = 0x4, offset = 0x4, fixed_abs, tag = 'smem constant byte address 0x4 - core index']
  #allocation1 [shape = 'u32[144,128]{1,0:T(1,128)}', space=vmem, size = 0x12000, scoped, tag = 'internal scratch']
  %s0 = inlined_call_operand.hbm [shape: f32[32,128], index: 0, kind: input, shape index: {}]
  %s1 = inlined_call_operand.hbm [shape: f32[32,128], index: 1, kind: input, shape index: {}]
  %s2 = inlined_call_operand.hbm [shape: f32[128,128], index: 2, kind: input, shape index: {}]
  %s3 = inlined_call_operand.hbm [shape: f32[32,128], index: 3, kind: input, shape index: {}]
  %s4 = inlined_call_operand.hbm [shape: f32[32,128], index: 4, kind: input, shape index: {}]
  %s5 = inlined_call_operand.hbm [shape: f32[32,128], index: 5, kind: output, shape index: {}]
  %s6 = sld [smem:[#allocation0]]
  $region50: #{tpu_custom_call.1} parent=0
    _
  %s8 = ssub.s32 1, %s6
  %s9 = scalar_select 0, %s8, %s6
  $region1: #{tpu_custom_call.1} parent=0
    #allocation2 [shape = 'u8[16384]{0}', space=vmem, size = 0x4000, scoped, tag = 'input window, operand 0, single buffered']
    #allocation3 [shape = 's32[1]{0}', space=sflag, size = 0x4, scoped, tag = 'scoped memory for tpu_custom_call.1']
    #allocation4 [shape = 's32[1]{0}', space=sflag, size = 0x4, scoped, tag = 'scoped memory for tpu_custom_call.1']
    #allocation5 [shape = 'u8[16384]{0}', space=vmem, size = 0x4000, scoped, tag = 'input window, operand 1, single buffered']
    #allocation6 [shape = 's32[1]{0}', space=sflag, size = 0x4, scoped, tag = 'scoped memory for tpu_custom_call.1']
    #allocation7 [shape = 'u8[65536]{0}', space=vmem, size = 0x10000, scoped, tag = 'input window, operand 2, single buffered']
    #allocation8 [shape = 'u8[16384]{0}', space=vmem, size = 0x4000, scoped, tag = 'input window, operand 3, single buffered']
    #allocation9 [shape = 's32[1]{0}', space=sflag, size = 0x4, scoped, tag = 'scoped memory for tpu_custom_call.1']
    #allocation10 [shape = 'u8[16384]{0}', space=vmem, size = 0x4000, scoped, tag = 'input window, operand 4, single buffered']
    #allocation11 [shape = 'u8[16384]{0}', space=vmem, size = 0x4000, scoped, tag = 'output window, operand 0, single buffered']
    %10 = vsyncpa [#allocation3], 0
    %11 = vsyncpa [#allocation6], 0
    %12 = vsyncpa [#allocation9], 0
    %13 = vsyncpa [#allocation4], 0
    // Predicated region
    $region2: #{tpu_custom_call.1} parent=1 // pred_check
      _
    $region3: #{tpu_custom_call.1} parent=1 // pred_check_branch
      %15 = sbr.rel (0) target = $region5
    $region4: #{tpu_custom_call.1} parent=1 // pred_region
      %s17 = ssub.s32 512, 512
      %18 = vsyncadd [#allocation3], %s17
      %s19 = sshll.u32 [#allocation2], 4
      %s20 = int_to_ptr.vmem [resolvable:$true] %s19
      %25 = dma.hbm_to_vmem [thread:$0]  %s0, 512, %s20, [#allocation3], 128, 128, 8
    $region5: #{tpu_custom_call.1} parent=1 // pred_fallthru
      _
    // Predicated region
    $region6: #{tpu_custom_call.1} parent=1 // pred_check
      _
    $region7: #{tpu_custom_call.1} parent=1 // pred_check_branch
      %27 = sbr.rel (0) target = $region9
    $region8: #{tpu_custom_call.1} parent=1 // pred_region
      %s29 = ssub.s32 512, 512
      %30 = vsyncadd [#allocation6], %s29
      %s31 = sshll.u32 [#allocation5], 4
      %s32 = int_to_ptr.vmem [resolvable:$true] %s31
      %37 = dma.hbm_to_vmem [thread:$0]  %s1, 512, %s32, [#allocation6], 128, 128, 8
    $region9: #{tpu_custom_call.1} parent=1 // pred_fallthru
      _
    // Predicated region
    $region10: #{tpu_custom_call.1} parent=1 // pred_check
      _
    $region11: #{tpu_custom_call.1} parent=1 // pred_check_branch
      %39 = sbr.rel (0) target = $region13
    $region12: #{tpu_custom_call.1} parent=1 // pred_region
      %s41 = ssub.s32 2048, 2048
      %42 = vsyncadd [#allocation6], %s41
      %s43 = sshll.u32 [#allocation7], 4
      %s44 = int_to_ptr.vmem [resolvable:$true] %s43
      %49 = dma.hbm_to_vmem [thread:$0]  %s2, 2048, %s44, [#allocation6], 128, 128, 8
    $region13: #{tpu_custom_call.1} parent=1 // pred_fallthru
      _
    // Predicated region
    $region14: #{tpu_custom_call.1} parent=1 // pred_check
      _
    $region15: #{tpu_custom_call.1} parent=1 // pred_check_branch
      %51 = sbr.rel (0) target = $region17
    $region16: #{tpu_custom_call.1} parent=1 // pred_region
      %s53 = ssub.s32 512, 512
      %54 = vsyncadd [#allocation9], %s53
      %s55 = sshll.u32 [#allocation8], 4
      %s56 = int_to_ptr.vmem [resolvable:$true] %s55
      %61 = dma.hbm_to_vmem [thread:$0]  %s3, 512, %s56, [#allocation9], 128, 128, 8
    $region17: #{tpu_custom_call.1} parent=1 // pred_fallthru
      _
    // Predicated region
    $region18: #{tpu_custom_call.1} parent=1 // pred_check
      _
    $region19: #{tpu_custom_call.1} parent=1 // pred_check_branch
      %63 = sbr.rel (0) target = $region21
    $region20: #{tpu_custom_call.1} parent=1 // pred_region
      %s65 = ssub.s32 512, 512
      %66 = vsyncadd [#allocation9], %s65
      %s67 = sshll.u32 [#allocation10], 4
      %s68 = int_to_ptr.vmem [resolvable:$true] %s67
      %73 = dma.hbm_to_vmem [thread:$0]  %s4, 512, %s68, [#allocation9], 128, 128, 8
    $region21: #{tpu_custom_call.1} parent=1 // pred_fallthru
      _
    // Predicated region
    $region22: #{tpu_custom_call.1} parent=1 // pred_check
      _
    $region23: #{tpu_custom_call.1} parent=1 // pred_check_branch
      %75 = sbr.rel (0) target = $region25
    $region24: #{tpu_custom_call.1} parent=1 // pred_region
      %76 = dma.done [#allocation3], 512
    $region25: #{tpu_custom_call.1} parent=1 // pred_fallthru
      _
    // Predicated region
    $region26: #{tpu_custom_call.1} parent=1 // pred_check
      _
    $region27: #{tpu_custom_call.1} parent=1 // pred_check_branch
      %78 = sbr.rel (0) target = $region29
    $region28: #{tpu_custom_call.1} parent=1 // pred_region
      %79 = dma.done [#allocation6], 512
    $region29: #{tpu_custom_call.1} parent=1 // pred_fallthru
      _
    // Predicated region
    $region30: #{tpu_custom_call.1} parent=1 // pred_check
      _
    $region31: #{tpu_custom_call.1} parent=1 // pred_check_branch
      %81 = sbr.rel (0) target = $region33
    $region32: #{tpu_custom_call.1} parent=1 // pred_region
      %82 = dma.done [#allocation6], 2048
    $region33: #{tpu_custom_call.1} parent=1 // pred_fallthru
      _
    // Predicated region
    $region34: #{tpu_custom_call.1} parent=1 // pred_check
      _
    $region35: #{tpu_custom_call.1} parent=1 // pred_check_branch
      %84 = sbr.rel (0) target = $region37
    $region36: #{tpu_custom_call.1} parent=1 // pred_region
      %85 = dma.done [#allocation9], 512
    $region37: #{tpu_custom_call.1} parent=1 // pred_fallthru
      _
    // Predicated region
    $region38: #{tpu_custom_call.1} parent=1 // pred_check
      _
    $region39: #{tpu_custom_call.1} parent=1 // pred_check_branch
      %87 = sbr.rel (0) target = $region41
    $region40: #{tpu_custom_call.1} parent=1 // pred_region
      %88 = dma.done [#allocation9], 512
    $region41: #{tpu_custom_call.1} parent=1 // pred_fallthru
      _
    %v89 = vld [vmem:[#allocation2] sm:$0xff]
    %v90 = vld [vmem:[#allocation2 + $0x8] sm:$0xff]
    %v91 = vld [vmem:[#allocation2 + $0x10] sm:$0xff]
    %v92 = vld [vmem:[#allocation2 + $0x18] sm:$0xff]
    %v93 = vld [vmem:[#allocation5] sm:$0xff]
    %v94 = vld [vmem:[#allocation5 + $0x8] sm:$0xff]
    %v95 = vld [vmem:[#allocation5 + $0x10] sm:$0xff]
    %v96 = vld [vmem:[#allocation5 + $0x18] sm:$0xff]
    %v97 = vmul.f32 %v89, %v93
    %v98 = vmul.f32 %v90, %v94
    %v99 = vmul.f32 %v91, %v95
    %v100 = vmul.f32 %v92, %v96
    %v101 = vld [vmem:[#allocation7] sm:$0xff]
    %v102 = vld [vmem:[#allocation7 + $0x8] sm:$0xff]
    %v103 = vld [vmem:[#allocation7 + $0x10] sm:$0xff]
    %v104 = vld [vmem:[#allocation7 + $0x18] sm:$0xff]
    %v105 = vld [vmem:[#allocation7 + $0x20] sm:$0xff]
    %v106 = vld [vmem:[#allocation7 + $0x28] sm:$0xff]
    %v107 = vld [vmem:[#allocation7 + $0x30] sm:$0xff]
    %v108 = vld [vmem:[#allocation7 + $0x38] sm:$0xff]
    %v109 = vld [vmem:[#allocation7 + $0x40] sm:$0xff]
    %v110 = vld [vmem:[#allocation7 + $0x48] sm:$0xff]
    %v111 = vld [vmem:[#allocation7 + $0x50] sm:$0xff]
    %v112 = vld [vmem:[#allocation7 + $0x58] sm:$0xff]
    %v113 = vld [vmem:[#allocation7 + $0x60] sm:$0xff]
    %v114 = vld [vmem:[#allocation7 + $0x68] sm:$0xff]
    %v115 = vld [vmem:[#allocation7 + $0x70] sm:$0xff]
    %v116 = vld [vmem:[#allocation7 + $0x78] sm:$0xff]
    %117 = vmatprep.subr.mxu0 0.0
    %118 = vmatpush1.msra.mxu0 %v101
    %119 = vmatprep.subr.mxu0 0.0
    %120 = vmatpush1.msra.mxu0 %v102
    %121 = vmatprep.subr.mxu0 0.0
    %122 = vmatpush1.msra.mxu0 %v103
    %123 = vmatprep.subr.mxu0 0.0
    %124 = vmatpush1.msra.mxu0 %v104
    %125 = vmatprep.subr.mxu0 0.0
    %126 = vmatpush1.msra.mxu0 %v105
    %127 = vmatprep.subr.mxu0 0.0
    %128 = vmatpush1.msra.mxu0 %v106
    %129 = vmatprep.subr.mxu0 0.0
    %130 = vmatpush1.msra.mxu0 %v107
    %131 = vmatprep.subr.mxu0 0.0
    %132 = vmatpush1.msra.mxu0 %v108
    %133 = vmatprep.subr.mxu0 0.0
    %134 = vmatpush1.msra.mxu0 %v109
    %135 = vmatprep.subr.mxu0 0.0
    %136 = vmatpush1.msra.mxu0 %v110
    %137 = vmatprep.subr.mxu0 0.0
    %138 = vmatpush1.msra.mxu0 %v111
    %139 = vmatprep.subr.mxu0 0.0
    %140 = vmatpush1.msra.mxu0 %v112
    %141 = vmatprep.subr.mxu0 0.0
    %142 = vmatpush1.msra.mxu0 %v113
    %143 = vmatprep.subr.mxu0 0.0
    %144 = vmatpush1.msra.mxu0 %v114
    %145 = vmatprep.subr.mxu0 0.0
    %146 = vmatpush1.msra.mxu0 %v115
    %147 = vmatprep.subr.mxu0 0.0
    %148 = vmatpush1.msra.mxu0 %v116
    %149 = vmatprep.subr.mxu0 0.0
    %150 = vmatpush1.msra.mxu0 0.0
    %151 = vmatprep.subr.mxu0 0.0
    %152 = vmatpush1.msra.mxu0 0.0
    %153 = vmatprep.subr.mxu0 0.0
    %154 = vmatpush1.msra.mxu0 0.0
    %155 = vmatprep.subr.mxu0 0.0
    %156 = vmatpush1.msra.mxu0 0.0
    %157 = vmatprep.subr.mxu0 0.0
    %158 = vmatpush1.msra.mxu0 0.0
    %159 = vmatprep.subr.mxu0 0.0
    %160 = vmatpush1.msra.mxu0 0.0
    %161 = vmatprep.subr.mxu0 0.0
    %162 = vmatpush1.msra.mxu0 0.0
    %163 = vmatprep.subr.mxu0 0.0
    %164 = vmatpush1.msra.mxu0 0.0
    %165 = vmatprep.subr.mxu0 0.0
    %166 = vmatpush1.msra.mxu0 0.0
    %167 = vmatprep.subr.mxu0 0.0
    %168 = vmatpush1.msra.mxu0 0.0
    %169 = vmatprep.subr.mxu0 0.0
    %170 = vmatpush1.msra.mxu0 0.0
    %171 = vmatprep.subr.mxu0 0.0
    %172 = vmatpush1.msra.mxu0 0.0
    %173 = vmatprep.subr.mxu0 0.0
    %174 = vmatpush1.msra.mxu0 0.0
    %175 = vmatprep.subr.mxu0 0.0
    %176 = vmatpush1.msra.mxu0 0.0
    %177 = vmatprep.subr.mxu0 0.0
    %178 = vmatpush1.msra.mxu0 0.0
    %179 = vmatprep.subr.mxu0 0.0
    %180 = vmatpush1.msra.mxu0 0.0
    %181 = vmatprep.mubr.f32.mxu0 0.0
    %182 = vmatmul.mubr.f32.gmra.mrb[0].mxu0 %v97
    %v183 = vpop.f32.mrb[0].mxu0
    %v184 = vadd.f32 0.0, %v183
    %v185 = vpop.f32.mrb[0].mxu0
    %186 = vmatprep.mubr.f32.mxu0 0.0
    %187 = vmatmul.mubr.f32.gmra.mrb[0].mxu0 %v98
    %v188 = vpop.f32.mrb[0].mxu0
    %v189 = vadd.f32 0.0, %v188
    %v190 = vpop.f32.mrb[0].mxu0
    %191 = vmatprep.mubr.f32.mxu0 0.0
    %192 = vmatmul.mubr.f32.gmra.mrb[0].mxu0 %v99
    %v193 = vpop.f32.mrb[0].mxu0
    %v194 = vadd.f32 0.0, %v193
    %v195 = vpop.f32.mrb[0].mxu0
    %196 = vmatprep.mubr.f32.mxu0 0.0
    %197 = vmatmul.mubr.f32.gmra.mrb[0].mxu0 %v100
    %v198 = vpop.f32.mrb[0].mxu0
    %v199 = vadd.f32 0.0, %v198
    %v200 = vpop.f32.mrb[0].mxu0
    %201 = vdwg.mxu0
    %v202 = vld [vmem:[#allocation8] sm:$0xff]
    %v203 = vld [vmem:[#allocation8 + $0x8] sm:$0xff]
    %v204 = vld [vmem:[#allocation8 + $0x10] sm:$0xff]
    %v205 = vld [vmem:[#allocation8 + $0x18] sm:$0xff]
    %v206 = vmul.f32 %v184, %v202
    %v207 = vmul.f32 %v189, %v203
    %v208 = vmul.f32 %v194, %v204
    %v209 = vmul.f32 %v199, %v205
    %v210 = vld [vmem:[#allocation10] sm:$0xff]
    %v211 = vld [vmem:[#allocation10 + $0x8] sm:$0xff]
    %v212 = vld [vmem:[#allocation10 + $0x10] sm:$0xff]
    %v213 = vld [vmem:[#allocation10 + $0x18] sm:$0xff]
    %v214 = vadd.f32 %v206, %v210
    %v215 = vadd.f32 %v207, %v211
    %v216 = vadd.f32 %v208, %v212
    %v217 = vadd.f32 %v209, %v213
    %218 = vst [vmem:[#allocation11] sm:$0xff] %v214
    %219 = vst [vmem:[#allocation11 + $0x8] sm:$0xff] %v215
    %220 = vst [vmem:[#allocation11 + $0x10] sm:$0xff] %v216
    %221 = vst [vmem:[#allocation11 + $0x18] sm:$0xff] %v217
    // Predicated region
    $region42: #{tpu_custom_call.1} parent=1 // pred_check
      _
    $region43: #{tpu_custom_call.1} parent=1 // pred_check_branch
      %223 = sbr.rel (0) target = $region45
    $region44: #{tpu_custom_call.1} parent=1 // pred_region
      %s225 = ssub.s32 512, 512
      %226 = vsyncadd [#allocation4], %s225
      %s227 = sshll.u32 [#allocation11], 4
      %s228 = int_to_ptr.vmem [resolvable:$true] %s227
      %233 = dma.vmem_to_hbm [thread:$0]  %s228, 512, %s5, [#allocation4], 128, 128, 8
    $region45: #{tpu_custom_call.1} parent=1 // pred_fallthru
      _
    // Predicated region
    $region46: #{tpu_custom_call.1} parent=1 // pred_check
      _
    $region47: #{tpu_custom_call.1} parent=1 // pred_check_branch
      %235 = sbr.rel (0) target = $region49
    $region48: #{tpu_custom_call.1} parent=1 // pred_region
      %236 = dma.done [#allocation4], 512
    $region49: #{tpu_custom_call.1} parent=1 // pred_fallthru
      _
    %237 = vsyncpa [#allocation3], 1
    %238 = vsyncpa [#allocation6], 1
    %239 = vsyncpa [#allocation9], 1
    %240 = vsyncpa [#allocation4], 1

</llo_original>
